<compile_context>
chip_gen: v7x
topology: tpu7x:2x2x1
jax: 0.10.0
libtpu: 0.0.40
codegen_flags: <defaults>
</compile_context>

<pallas_src>
import jax
import jax.numpy as jnp
from jax.experimental import pallas as pl
from jax.experimental.pallas import tpu as pltpu

_MIB = 1024 * 1024


# ---------------------------------------------------------------------------
# Kernel
# ---------------------------------------------------------------------------
def _make_tv_kernel(h, w):
    """TV kernel over lane-flattened (bc, h*w) blocks."""
    L = h * w

    def kernel(x_ref, h_ref, w_ref):
        # x_ref: (bc, L) block of the (N*C, H*W) input (lane-dense slabs).
        # h_ref / w_ref: (1, 1, L) per-core accumulators of per-position
        # squared diffs, resident across the "arbitrary" k axis.
        k = pl.program_id(1)

        @pl.when(k == 0)
        def _():
            h_ref[...] = jnp.zeros_like(h_ref)
            w_ref[...] = jnp.zeros_like(w_ref)

        x = x_ref[...].astype(jnp.float32)               # (bc, L), f32 accum

        if h > 1:
            # roll(x, L-w)[:, j] == x[:, (j + w) % L]: row-below neighbour for
            # j < (h-1)*w.  Wrapped lanes j >= (h-1)*w are NOT masked here;
            # the wrapper drops them from the reduction (perf review #1).
            d = pltpu.roll(x, L - w, axis=1) - x
            h_ref[...] += jnp.sum(d * d, axis=0, keepdims=True)[None]

        if w > 1:
            # roll(x, L-1)[:, j] == x[:, (j + 1) % L]: right neighbour for
            # lanes with j % w != w-1; seam lanes are dropped in the wrapper.
            d = pltpu.roll(x, L - 1, axis=1) - x
            w_ref[...] += jnp.sum(d * d, axis=0, keepdims=True)[None]

    return kernel


# ---------------------------------------------------------------------------
# Device / tiling helpers
# ---------------------------------------------------------------------------
def _tpu_info():
    """Best-effort (vmem_capacity_bytes, tensorcores_per_chip)."""
    vmem_cap = 64 * _MIB                         # conservative default (v7x)
    try:
        vmem_cap = int(pltpu.get_tpu_info().vmem_capacity_bytes)
    except Exception:
        pass
    cores = 1
    try:
        kind = jax.devices()[0].device_kind.lower()
        if "v7" in kind or "7x" in kind:         # v7x: 2 TensorCores / chip
            cores = 2
    except Exception:
        pass
    return vmem_cap, cores


def _pick_tiling(nc, L, in_itemsize, vmem_cap, two_tc):
    """Return (num_cores, bc, steps, pad_slabs), or None if one (H, W) plane
    is too large for the untiled-plane kernel (caller falls back)."""
    slab_f32 = L * 4
    # Per-slab-per-block VMEM: double-buffered input + ~3 f32 temporaries
    # (cast copy, rolled copy, squared diff).
    per_slab = 2 * L * in_itemsize + 3 * slab_f32
    budget = int(0.45 * vmem_cap)
    if per_slab > budget:
        return None
    # Bigger blocks on 128 MiB-VMEM chips (v5e/v6e), smaller on v7x (review #7).
    target = 8 * _MIB if vmem_cap >= 100 * _MIB else 4 * _MIB

    bc_max = max(1, budget // per_slab)
    core_options = [2, 1] if (two_tc and nc % 2 == 0 and nc >= 16) else [1]

    for num_cores in core_options:
        nc_c = nc // num_cores
        bc_cap = max(1, min(nc_c, bc_max, max(1, target // slab_f32)))
        # (1) Largest multiple-of-8 divisor of the per-core slab count within
        #     the cap: aligned blocks, no input padding.
        for d in range(bc_cap - bc_cap % 8, 0, -8):
            if nc_c % d == 0:
                return num_cores, d, nc_c // d, 0
        # (2) One full-extent block (block dim == array dim is always legal).
        if num_cores == 1 and nc <= bc_max:
            return 1, nc, 1, 0

    # (3) Fallback: pad the slab axis so it tiles into multiple-of-8 blocks.
    #     (Costs an extra HBM pass; only hit for awkward slab counts.)
    if bc_max < 8:
        return None
    num_cores = core_options[0]
    bc_cap = max(8, min(bc_max, max(1, target // slab_f32)))
    bc = max(8, min(bc_cap, bc_max) // 8 * 8)
    per_core = -(-nc // num_cores)
    steps = -(-per_core // bc)
    return num_cores, bc, steps, num_cores * bc * steps - nc


def _vmem_limit(bc, L, in_itemsize, vmem_cap):
    est = (2 * bc * L * in_itemsize        # double-buffered input block
           + 3 * bc * L * 4                # f32 temporaries
           + 4 * 2 * L * 4                 # two (1, 1, L) accumulators (+wb)
           + 2 * _MIB)                     # slack
    return int(min(0.9 * vmem_cap, max(32 * _MIB, 2 * est)))


# ---------------------------------------------------------------------------
# Wrapper
# ---------------------------------------------------------------------------
def tv_loss(x, weight=1.0):
    """Total-variation loss matching PyTorch TVLoss.forward.  x: (N, C, H, W)."""
    n, c, h, w = x.shape
    nc = n * c
    L = h * w
    x_flat = x.reshape(nc, L)                 # free row-major reshape, lane-dense

    vmem_cap, tc_per_chip = _tpu_info()
    tiling = _pick_tiling(nc, L, x.dtype.itemsize, vmem_cap, tc_per_chip == 2)
    if tiling is None:
        # TODO(synk): add an H-tiled variant with a one-row halo for planes too
        # large to hold untiled in VMEM (e.g. 4K images on v7x's 64 MiB).
        return tv_loss_ref(x, weight)

    num_cores, bc, steps, pad = tiling
    if pad:
        # Zero slabs contribute exactly 0 to both TV terms.
        x_flat = jnp.pad(x_flat, ((0, pad), (0, 0)))

    flops = 8 * nc * L
    bytes_accessed = x_flat.size * x_flat.dtype.itemsize + 2 * num_cores * L * 4

    h_out, w_out = pl.pallas_call(
        _make_tv_kernel(h, w),
        out_shape=(
            jax.ShapeDtypeStruct((num_cores, 1, L), jnp.float32),
            jax.ShapeDtypeStruct((num_cores, 1, L), jnp.float32),
        ),
        grid_spec=pltpu.PrefetchScalarGridSpec(
            num_scalar_prefetch=0,
            grid=(num_cores, steps),
            in_specs=[
                # TODO(synk): sweep pipeline_mode=pl.Buffered(3) here (review #8)
                # once verified on the target chip.
                pl.BlockSpec((bc, L), lambda p, k: (p * steps + k, 0)),
            ],
            out_specs=[
                pl.BlockSpec((1, 1, L), lambda p, k: (p, 0, 0)),
                pl.BlockSpec((1, 1, L), lambda p, k: (p, 0, 0)),
            ],
        ),
        compiler_params=pltpu.CompilerParams(
            # TODO(synk): on v7x, switch axis 0 to pltpu.CORE_PARALLEL if a
            # trace shows one idle TensorCore (review #3).
            dimension_semantics=("parallel", "arbitrary"),
            vmem_limit_bytes=_vmem_limit(bc, L, x.dtype.itemsize, vmem_cap),
        ),
        cost_estimate=pl.CostEstimate(
            flops=flops, transcendentals=0, bytes_accessed=bytes_accessed
        ),
    )(x_flat)

    # Seam exclusion in the (tiny) wrapper reduction instead of per-element
    # in-kernel masking:
    #   h-term: lanes >= (h-1)*w hold the wrapped x[0,:]-x[h-1,:] diff.
    #   w-term: lanes with j % w == w-1 hold the wrapped row-end diff.
    h_tv = jnp.sum(h_out[:, :, : (h - 1) * w])
    w_tv = jnp.sum(w_out.reshape(num_cores, 1, h, w)[..., : w - 1])

    count_h = c * (h - 1) * w
    count_w = c * h * (w - 1)
    return weight * 2.0 * (h_tv / count_h + w_tv / count_w) / n


def tv_loss_ref(x, weight=1.0):
    """Pure-JAX reference for correctness checking."""
    n, c, h, w = x.shape
    count_h = c * (h - 1) * w
    count_w = c * h * (w - 1)
    h_tv = jnp.sum((x[:, :, 1:, :] - x[:, :, :-1, :]) ** 2)
    w_tv = jnp.sum((x[:, :, :, 1:] - x[:, :, :, :-1]) ** 2)
    return weight * 2.0 * (h_tv / count_h + w_tv / count_w) / n


if __name__ == "__main__":
    key = jax.random.PRNGKey(0)

    # Primary shape (matches the module spec).
    x = jax.random.normal(key, (2, 4, 16, 16), dtype=jnp.float32)
    out = jax.block_until_ready(tv_loss(x, weight=1.0))
    ref = tv_loss_ref(x, weight=1.0)
    assert jnp.allclose(out, ref, rtol=1e-5, atol=1e-5), (out, ref)

    # Non-multiple-of-8 slab count / non-128-multiple plane (full-block path).
    x2 = jax.random.normal(jax.random.PRNGKey(1), (1, 3, 20, 24), dtype=jnp.float32)
    out2 = jax.block_until_ready(tv_loss(x2, weight=0.5))
    ref2 = tv_loss_ref(x2, weight=0.5)
    assert jnp.allclose(out2, ref2, rtol=1e-5, atol=1e-5), (out2, ref2)

    print("KERNEL_OK")
</pallas_src>

<mosaic_0001>
module attributes {stable_mosaic.version = 11 : i64} {
  func.func @kernel(%arg0: i32, %arg1: i32, %arg2: memref<8x256xf32, #tpu.memory_space<vmem>>, %arg3: memref<1x1x256xf32, #tpu.memory_space<vmem>>, %arg4: memref<1x1x256xf32, #tpu.memory_space<vmem>>) attributes {dimension_semantics = [#tpu.dimension_semantics<parallel>, #tpu.dimension_semantics<arbitrary>], iteration_bounds = array<i64: 1, 1>, scalar_prefetch = 0 : i64, scratch_operands = 0 : i64, tpu.core_type = #tpu.core_type<tc>, window_params = [{transform_indices = @transform_0, window_bounds = array<i64: 8, 256>}, {transform_indices = @transform_1, window_bounds = array<i64: 1, 1, 256>}, {transform_indices = @transform_2, window_bounds = array<i64: 1, 1, 256>}]} {
    %c0_i32 = arith.constant 0 : i32
    %0 = arith.cmpi eq, %arg1, %c0_i32 : i32
    %1 = arith.extui %0 : i1 to i32
    %c0_i32_0 = arith.constant 0 : i32
    %2 = arith.cmpi ne, %1, %c0_i32_0 : i32
    scf.if %2 {
      %cst_15 = arith.constant 0.000000e+00 : f32
      %22 = vector.broadcast %cst_15 : f32 to vector<1x1x256xf32>
      %c0_16 = arith.constant 0 : index
      %c0_17 = arith.constant 0 : index
      %c0_18 = arith.constant 0 : index
      %23 = vector.load %arg3[%c0_16, %c0_17, %c0_18] : memref<1x1x256xf32, #tpu.memory_space<vmem>>, vector<1x1x256xf32>
      tpu.vector_store %arg3[%c0_16, %c0_17, %c0_18], %22 {strides = array<i32>} : memref<1x1x256xf32, #tpu.memory_space<vmem>>, vector<1x1x256xf32>,
      %cst_19 = arith.constant 0.000000e+00 : f32
      %24 = vector.broadcast %cst_19 : f32 to vector<1x1x256xf32>
      %c0_20 = arith.constant 0 : index
      %c0_21 = arith.constant 0 : index
      %c0_22 = arith.constant 0 : index
      %25 = vector.load %arg4[%c0_20, %c0_21, %c0_22] : memref<1x1x256xf32, #tpu.memory_space<vmem>>, vector<1x1x256xf32>
      tpu.vector_store %arg4[%c0_20, %c0_21, %c0_22], %24 {strides = array<i32>} : memref<1x1x256xf32, #tpu.memory_space<vmem>>, vector<1x1x256xf32>,
    } else {
    }
    %c0 = arith.constant 0 : index
    %c0_1 = arith.constant 0 : index
    %3 = vector.load %arg2[%c0, %c0_1] : memref<8x256xf32, #tpu.memory_space<vmem>>, vector<8x256xf32>
    %c240_i32 = arith.constant 240 : i32
    %4 = tpu.dynamic_rotate %3 by %c240_i32 dim 1 : vector<8x256xf32>, i32 -> vector<8x256xf32>
    %5 = arith.subf %4, %3 : vector<8x256xf32>
    %c0_2 = arith.constant 0 : index
    %c0_3 = arith.constant 0 : index
    %c0_4 = arith.constant 0 : index
    %6 = vector.load %arg3[%c0_2, %c0_3, %c0_4] : memref<1x1x256xf32, #tpu.memory_space<vmem>>, vector<1x1x256xf32>
    %7 = arith.mulf %5, %5 : vector<8x256xf32>
    %cst = arith.constant dense<0.000000e+00> : vector<256xf32>
    %8 = vector.multi_reduction <add>, %7, %cst [0] : vector<8x256xf32> to vector<256xf32>
    %9 = vector.shape_cast %8 : vector<256xf32> to vector<1x256xf32>
    %10 = vector.shape_cast %9 : vector<1x256xf32> to vector<1x1x256xf32>
    %11 = arith.addf %6, %10 : vector<1x1x256xf32>
    %c0_5 = arith.constant 0 : index
    %c0_6 = arith.constant 0 : index
    %c0_7 = arith.constant 0 : index
    %12 = vector.load %arg3[%c0_5, %c0_6, %c0_7] : memref<1x1x256xf32, #tpu.memory_space<vmem>>, vector<1x1x256xf32>
    tpu.vector_store %arg3[%c0_5, %c0_6, %c0_7], %11 {strides = array<i32>} : memref<1x1x256xf32, #tpu.memory_space<vmem>>, vector<1x1x256xf32>,
    %c255_i32 = arith.constant 255 : i32
    %13 = tpu.dynamic_rotate %3 by %c255_i32 dim 1 : vector<8x256xf32>, i32 -> vector<8x256xf32>
    %14 = arith.subf %13, %3 : vector<8x256xf32>
    %c0_8 = arith.constant 0 : index
    %c0_9 = arith.constant 0 : index
    %c0_10 = arith.constant 0 : index
    %15 = vector.load %arg4[%c0_8, %c0_9, %c0_10] : memref<1x1x256xf32, #tpu.memory_space<vmem>>, vector<1x1x256xf32>
    %16 = arith.mulf %14, %14 : vector<8x256xf32>
    %cst_11 = arith.constant dense<0.000000e+00> : vector<256xf32>
    %17 = vector.multi_reduction <add>, %16, %cst_11 [0] : vector<8x256xf32> to vector<256xf32>
    %18 = vector.shape_cast %17 : vector<256xf32> to vector<1x256xf32>
    %19 = vector.shape_cast %18 : vector<1x256xf32> to vector<1x1x256xf32>
    %20 = arith.addf %15, %19 : vector<1x1x256xf32>
    %c0_12 = arith.constant 0 : index
    %c0_13 = arith.constant 0 : index
    %c0_14 = arith.constant 0 : index
    %21 = vector.load %arg4[%c0_12, %c0_13, %c0_14] : memref<1x1x256xf32, #tpu.memory_space<vmem>>, vector<1x1x256xf32>
    tpu.vector_store %arg4[%c0_12, %c0_13, %c0_14], %20 {strides = array<i32>} : memref<1x1x256xf32, #tpu.memory_space<vmem>>, vector<1x1x256xf32>,
    return
  }
  func.func @transform_0(%arg0: i32, %arg1: i32) -> (i32, i32) {
    %c1_i32 = arith.constant 1 : i32
    %0 = arith.muli %arg0, %c1_i32 : i32
    %1 = arith.addi %0, %arg1 : i32
    %c0_i32 = arith.constant 0 : i32
    %c0_i32_0 = arith.constant 0 : i32
    return %1, %c0_i32 : i32, i32
  }
  func.func @transform_1(%arg0: i32, %arg1: i32) -> (i32, i32, i32) {
    %c0_i32 = arith.constant 0 : i32
    %c0_i32_0 = arith.constant 0 : i32
    %c0_i32_1 = arith.constant 0 : i32
    return %arg0, %c0_i32, %c0_i32_0 : i32, i32, i32
  }
  func.func @transform_2(%arg0: i32, %arg1: i32) -> (i32, i32, i32) {
    %c0_i32 = arith.constant 0 : i32
    %c0_i32_0 = arith.constant 0 : i32
    %c0_i32_1 = arith.constant 0 : i32
    return %arg0, %c0_i32, %c0_i32_0 : i32, i32, i32
  }
}

</mosaic_0001>

<llo_original>
// kernel: tpu_custom_call.1
$region0: #{tpu_custom_call.1}
  #allocation0 [shape = 'u32[]', space=smem, size = 0x4, offset = 0x4, fixed_abs, tag = 'smem constant byte address 0x4 - core index']
  #allocation1 [shape = 'u32[144,128]{1,0:T(1,128)}', space=vmem, size = 0x12000, scoped, tag = 'internal scratch']
  %s0 = inlined_call_operand.hbm [shape: f32[8,256], index: 0, kind: input, shape index: {}]
  %s1 = inlined_call_operand.hbm [shape: f32[1,1,256], index: 1, kind: output, shape index: {0}]
  %s2 = inlined_call_operand.hbm [shape: f32[1,1,256], index: 2, kind: output, shape index: {1}]
  %3 = xla_tuple %s1, %s2
  %s4 = sld [smem:[#allocation0]]
  $region30: #{tpu_custom_call.1} parent=0
    _
  %s6 = ssub.s32 1, %s4
  %s7 = scalar_select 0, %s6, %s4
  $region1: #{tpu_custom_call.1} parent=0
    #allocation2 [shape = 'u8[8192]{0}', space=vmem, size = 0x2000, scoped, tag = 'input window, operand 0, single buffered']
    #allocation3 [shape = 's32[1]{0}', space=sflag, size = 0x4, scoped, tag = 'scoped memory for tpu_custom_call.1']
    #allocation4 [shape = 's32[1]{0}', space=sflag, size = 0x4, scoped, tag = 'scoped memory for tpu_custom_call.1']
    #allocation5 [shape = 'u8[1024]{0}', space=vmem, size = 0x400, scoped, tag = 'output window, operand 0, single buffered']
    #allocation6 [shape = 'u8[1024]{0}', space=vmem, size = 0x400, scoped, tag = 'output window, operand 1, single buffered']
    #allocation7 [shape = 's32[1]{0}', space=sflag, size = 0x4, scoped, tag = 'scoped memory for tpu_custom_call.1']
    %8 = vsyncpa [#allocation3], 0
    %9 = vsyncpa [#allocation4], 0
    %10 = vsyncpa [#allocation7], 0
    // Predicated region
    $region2: #{tpu_custom_call.1} parent=1 // pred_check
      _
    $region3: #{tpu_custom_call.1} parent=1 // pred_check_branch
      %12 = sbr.rel (0) target = $region5
    $region4: #{tpu_custom_call.1} parent=1 // pred_region
      %s13 = sadd.s32 0, 0
      %s15 = ssub.s32 256, 256
      %16 = vsyncadd [#allocation3], %s15
      %s17 = smul.addr %s13, 2
      %s18 = smul.addr %s17, 128
      %s19 = scalar_lea.hbm %s0, %s18
      %s21 = sshll.u32 [#allocation2], 4
      %s22 = int_to_ptr.vmem [resolvable:$true] %s21
      %24 = dma.hbm_to_vmem [thread:$0]  %s19, 256, %s22, [#allocation3]
    $region5: #{tpu_custom_call.1} parent=1 // pred_fallthru
      _
    // Predicated region
    $region6: #{tpu_custom_call.1} parent=1 // pred_check
      _
    $region7: #{tpu_custom_call.1} parent=1 // pred_check_branch
      %26 = sbr.rel (0) target = $region9
    $region8: #{tpu_custom_call.1} parent=1 // pred_region
      %27 = dma.done [#allocation3], 256
    $region9: #{tpu_custom_call.1} parent=1 // pred_fallthru
      _
    %s28 = sadd.s32 0, 0
    %p29 = scmp.eq.s32.totalorder 0, 0
    // Predicated region
    $region10: #{tpu_custom_call.1} parent=1 // pred_check
      %p30 = pneg %p29
    $region11: #{tpu_custom_call.1} parent=1 // pred_check_branch
      %32 = sbr.rel (%p30) target = $region13
    $region12: #{tpu_custom_call.1} parent=1 // pred_region
      %v33 = vlaneseq
      %vm34 = vcmp.ge.s32.totalorder %v33, 0
      %vm35 = vcmp.lt.s32.totalorder %v33, 256
      %vm36 = vmand %vm34, %vm35
      %37 = vst.msk [vmem:[#allocation5] sm:$0x3] %vm36, 0.0
      %38 = vst.msk [vmem:[#allocation6] sm:$0x3] %vm36, 0.0
    $region13: #{tpu_custom_call.1} parent=1 // pred_fallthru
      _
    %v39 = vld [vmem:[#allocation2] sm:$0xff]
    %v40 = vld [vmem:[#allocation2 + $0x8] sm:$0xff]
    %41 = vrot.lane.b32.xlu0 %v39, 112
    %v42 = vpop.permute.xlu0 %41
    %43 = vrot.lane.b32.xlu0 %v40, 112
    %v44 = vpop.permute.xlu0 %43
    %v45 = vlaneseq
    %v46 = vand.u32 %v45, 127
    %vm47 = vcmp.lt.s32.totalorder %v46, 112
    %v48 = vsel %vm47, %v42, %v44
    %v49 = vsel %vm47, %v44, %v42
    %v50 = vsub.f32 %v48, %v39
    %v51 = vsub.f32 %v49, %v40
    %v52 = vld [vmem:[#allocation5] sm:$0x3]
    %v53 = vmul.f32 %v50, %v50
    %v54 = vmul.f32 %v51, %v51
    %v55 = vrot.slane %v53, 4
    %v56 = vadd.f32 %v53, %v55
    %v57 = vrot.slane %v56, 2
    %v58 = vadd.f32 %v56, %v57
    %v59 = vrot.slane %v58, 1
    %v60 = vadd.f32 %v58, %v59
    %v61 = vrot.slane %v54, 4
    %v62 = vadd.f32 %v54, %v61
    %v63 = vrot.slane %v62, 2
    %v64 = vadd.f32 %v62, %v63
    %v65 = vrot.slane %v64, 1
    %v66 = vadd.f32 %v64, %v65
    %v69 = vcombine.low %v60, %v66
    %v71 = vunpack.c.l.s4 1966171168
    %v72 = vunpack.c.0.s8 %v71
    %v73 = vlaneseq
    %v74 = vshrl.u32 %v73, 7
    %v75 = vsub.s32 %v72, %v74
    %v76 = vrot.slane %v69, %v75
    %v78 = vunpack.c.l.s4 1966171168
    %v79 = vunpack.c.0.s8 %v78
    %v80 = vlaneseq
    %v81 = vshrl.u32 %v80, 7
    %v82 = vsub.s32 %v79, %v81
    %v83 = vrot.slane %v76, %v82
    %v85 = vadd.f32 %v52, %v83
    %v86 = vlaneseq
    %vm87 = vcmp.ge.s32.totalorder %v86, 0
    %vm88 = vcmp.lt.s32.totalorder %v86, 256
    %vm89 = vmand %vm87, %vm88
    %90 = vst.msk [vmem:[#allocation5] sm:$0x3] %vm89, %v85
    %91 = vrot.lane.b32.xlu0 %v39, 127
    %v92 = vpop.permute.xlu0 %91
    %93 = vrot.lane.b32.xlu0 %v40, 127
    %v94 = vpop.permute.xlu0 %93
    %vm95 = vcmp.lt.s32.totalorder %v46, 127
    %v96 = vsel %vm95, %v92, %v94
    %v97 = vsel %vm95, %v94, %v92
    %v98 = vsub.f32 %v96, %v39
    %v99 = vsub.f32 %v97, %v40
    %v100 = vld [vmem:[#allocation6] sm:$0x3]
    %v101 = vmul.f32 %v98, %v98
    %v102 = vmul.f32 %v99, %v99
    %v103 = vrot.slane %v101, 4
    %v104 = vadd.f32 %v101, %v103
    %v105 = vrot.slane %v104, 2
    %v106 = vadd.f32 %v104, %v105
    %v107 = vrot.slane %v106, 1
    %v108 = vadd.f32 %v106, %v107
    %v109 = vrot.slane %v102, 4
    %v110 = vadd.f32 %v102, %v109
    %v111 = vrot.slane %v110, 2
    %v112 = vadd.f32 %v110, %v111
    %v113 = vrot.slane %v112, 1
    %v114 = vadd.f32 %v112, %v113
    %v117 = vcombine.low %v108, %v114
    %v119 = vunpack.c.l.s4 1966171168
    %v120 = vunpack.c.0.s8 %v119
    %v121 = vlaneseq
    %v122 = vshrl.u32 %v121, 7
    %v123 = vsub.s32 %v120, %v122
    %v124 = vrot.slane %v117, %v123
    %v126 = vunpack.c.l.s4 1966171168
    %v127 = vunpack.c.0.s8 %v126
    %v128 = vlaneseq
    %v129 = vshrl.u32 %v128, 7
    %v130 = vsub.s32 %v127, %v129
    %v131 = vrot.slane %v124, %v130
    %v133 = vadd.f32 %v100, %v131
    %134 = vst.msk [vmem:[#allocation6] sm:$0x3] %vm89, %v133
    // Predicated region
    $region14: #{tpu_custom_call.1} parent=1 // pred_check
      _
    $region15: #{tpu_custom_call.1} parent=1 // pred_check_branch
      %136 = sbr.rel (0) target = $region17
    $region16: #{tpu_custom_call.1} parent=1 // pred_region
      %s138 = ssub.s32 32, 32
      %139 = vsyncadd [#allocation4], %s138
      %s141 = sshll.u32 [#allocation5], 4
      %s142 = int_to_ptr.vmem [resolvable:$true] %s141
      %144 = dma.vmem_to_hbm [thread:$0]  %s142, 32, %s1, [#allocation4]
    $region17: #{tpu_custom_call.1} parent=1 // pred_fallthru
      _
    // Predicated region
    $region18: #{tpu_custom_call.1} parent=1 // pred_check
      _
    $region19: #{tpu_custom_call.1} parent=1 // pred_check_branch
      %146 = sbr.rel (0) target = $region21
    $region20: #{tpu_custom_call.1} parent=1 // pred_region
      %s148 = ssub.s32 32, 32
      %149 = vsyncadd [#allocation7], %s148
      %s151 = sshll.u32 [#allocation6], 4
      %s152 = int_to_ptr.vmem [resolvable:$true] %s151
      %154 = dma.vmem_to_hbm [thread:$0]  %s152, 32, %s2, [#allocation7]
    $region21: #{tpu_custom_call.1} parent=1 // pred_fallthru
      _
    // Predicated region
    $region22: #{tpu_custom_call.1} parent=1 // pred_check
      _
    $region23: #{tpu_custom_call.1} parent=1 // pred_check_branch
      %156 = sbr.rel (0) target = $region25
    $region24: #{tpu_custom_call.1} parent=1 // pred_region
      %157 = dma.done [#allocation4], 32
    $region25: #{tpu_custom_call.1} parent=1 // pred_fallthru
      _
    // Predicated region
    $region26: #{tpu_custom_call.1} parent=1 // pred_check
      _
    $region27: #{tpu_custom_call.1} parent=1 // pred_check_branch
      %159 = sbr.rel (0) target = $region29
    $region28: #{tpu_custom_call.1} parent=1 // pred_region
      %160 = dma.done [#allocation7], 32
    $region29: #{tpu_custom_call.1} parent=1 // pred_fallthru
      _
    %161 = vsyncpa [#allocation3], 1
    %162 = vsyncpa [#allocation4], 1
    %163 = vsyncpa [#allocation7], 1

</llo_original>
